<compile_context>
chip_gen: v5e
topology: v5e:2x2
jax: 0.10.0
libtpu: 0.0.40
codegen_flags: <defaults>
</compile_context>

<pallas_src>
import functools

import jax
import jax.numpy as jnp
from jax import lax
from jax.experimental import pallas as pl
from jax.experimental.pallas import tpu as pltpu


def _round_up(x, m):
    return (x + m - 1) // m * m


# ---------------------------------------------------------------------------
# One-time (import-time) hardware / capability queries.
# ---------------------------------------------------------------------------
def _query_vmem_capacity():
    try:
        return int(pltpu.get_tpu_info().vmem_capacity_bytes)
    except Exception:
        return 64 * 1024 * 1024          # conservative (v7x-sized) fallback


_VMEM_CAP = _query_vmem_capacity()
if _VMEM_CAP >= 100 * 1024 * 1024:       # v5e / v6e: 128 MiB per TensorCore
    _VMEM_BUDGET = 96 * 1024 * 1024
    _N_CHUNK = 512
else:                                    # v7x: 64 MiB per TensorCore
    _VMEM_BUDGET = max(_VMEM_CAP - 10 * 1024 * 1024, (_VMEM_CAP * 3) // 4)
    _N_CHUNK = 256                       # one 256-wide MXU tile, smaller f32 intermediate


def _probe_buffered():
    """Import-time probe: does this JAX accept pipeline_mode=pl.Buffered(1)?"""
    if not hasattr(pl, "Buffered"):
        return False
    try:
        spec = pl.BlockSpec((8, 128), lambda i: (0, 0), pipeline_mode=pl.Buffered(1))

        def k(a_ref, o_ref):
            o_ref[...] = a_ref[...]

        fn = pl.pallas_call(
            k,
            out_shape=jax.ShapeDtypeStruct((8, 128), jnp.float32),
            grid_spec=pltpu.PrefetchScalarGridSpec(
                num_scalar_prefetch=0,
                grid=(1,),
                in_specs=[spec],
                out_specs=pl.BlockSpec((8, 128), lambda i: (0, 0)),
            ),
        )
        jax.jit(fn).lower(jnp.zeros((8, 128), jnp.float32)).compile()
        return True
    except Exception:
        return False


_HAS_BUFFERED = _probe_buffered()
_WEIGHT_BUFS = 1 if _HAS_BUFFERED else 2


# ---------------------------------------------------------------------------
# Kernel
# ---------------------------------------------------------------------------
def _mlp_chunk(x, lo, width, w1_ref, b1_ref, w2_ref):
    # GEMM1 chunk (MXU, f32 acc) -> bias + ReLU (VPU, f32) -> GEMM2 chunk.
    h = jnp.dot(x, w1_ref[:, pl.ds(lo, width)], preferred_element_type=jnp.float32)
    h = jnp.maximum(h + b1_ref[:, pl.ds(lo, width)], 0.0)
    return jnp.dot(h.astype(w2_ref.dtype), w2_ref[pl.ds(lo, width), :],
                   preferred_element_type=jnp.float32)


def idea_layer_kernel(x_ref, w1_ref, b1_ref, w2_ref, b2_ref, o_ref, *scratch,
                      n_chunk, n1, unroll_threshold=4):
    # x_ref:  (tm, K1)  token tile (padded bert_dim), compute dtype
    # w1_ref: (K1, N1)  padded (bert_dim, 2*hidden)
    # b1_ref: (1,  N1)  f32
    # w2_ref: (N1, N2)  padded (2*hidden, hidden)
    # b2_ref: (1,  N2)  f32
    # o_ref:  (tm, N2)  output tile
    # scratch: optional f32 (tm, N2) accumulator (only when output dtype != f32)
    acc_ref = scratch[0] if scratch else o_ref

    x = x_ref[...]
    num_full = n1 // n_chunk             # static
    tail = n1 - num_full * n_chunk       # static, multiple of 128

    # Chunk 0 with the second bias folded in (saves one (tm, N2) epilogue pass).
    w0 = n_chunk if num_full > 0 else tail
    acc_ref[...] = _mlp_chunk(x, 0, w0, w1_ref, b1_ref, w2_ref) + b2_ref[...]

    rem = max(num_full - 1, 0)
    if rem > 0:
        if rem <= unroll_threshold:
            for c in range(1, num_full):
                acc_ref[...] += _mlp_chunk(x, c * n_chunk, n_chunk,
                                           w1_ref, b1_ref, w2_ref)
        else:
            # Many chunks: bounded fori_loop body keeps vreg live ranges small.
            def body(c, carry):
                lo = pl.multiple_of(c * n_chunk, 128)
                acc_ref[...] += _mlp_chunk(x, lo, n_chunk, w1_ref, b1_ref, w2_ref)
                return carry
            lax.fori_loop(1, num_full, body, 0)

    if num_full > 0 and tail > 0:
        acc_ref[...] += _mlp_chunk(x, num_full * n_chunk, tail,
                                   w1_ref, b1_ref, w2_ref)

    if scratch:
        o_ref[...] = acc_ref[...].astype(o_ref.dtype)


# ---------------------------------------------------------------------------
# Wrapper: pad/cast parameters once, return a jitted forward(x).
# ---------------------------------------------------------------------------
def make_idea_layer(w1, b1, w2, b2, *, compute_dtype=jnp.bfloat16,
                    max_tm=256, n_chunk=None):
    """Weights stored as (in, out).  Returns forward(x): (..., bert) -> (..., hidden)."""
    bert_dim, two_hidden = w1.shape
    hidden_dim = w2.shape[1]
    assert w2.shape[0] == two_hidden
    assert b1.shape == (two_hidden,) and b2.shape == (hidden_dim,)

    cdt = jnp.dtype(compute_dtype)
    n_chunk = _N_CHUNK if n_chunk is None else n_chunk

    # Lane-dense padding of feature dims to multiples of 128 -- done ONCE.
    K1 = _round_up(bert_dim, 128)
    N1 = _round_up(two_hidden, 128)
    N2 = _round_up(hidden_dim, 128)

    w1p = jnp.zeros((K1, N1), cdt).at[:bert_dim, :two_hidden].set(w1.astype(cdt))
    w2p = jnp.zeros((N1, N2), cdt).at[:two_hidden, :hidden_dim].set(w2.astype(cdt))
    b1p = jnp.zeros((1, N1), jnp.float32).at[0, :two_hidden].set(b1.astype(jnp.float32))
    b2p = jnp.zeros((1, N2), jnp.float32).at[0, :hidden_dim].set(b2.astype(jnp.float32))

    c_item = cdt.itemsize

    def apply_fn(x, w1p, b1p, w2p, b2p):
        lead = x.shape[:-1]
        assert x.shape[-1] == bert_dim
        x2d = x.reshape(-1, bert_dim)
        M = x2d.shape[0]
        out_dtype = x.dtype
        o_item = jnp.dtype(out_dtype).itemsize
        use_scratch = out_dtype != jnp.float32   # f32 output accumulates into o_ref

        # ----- choose token tile (static under jit) -----
        def vmem_bytes(tm_):
            b = tm_ * K1 * c_item * 2                    # double-buffered x tile
            b += tm_ * N2 * o_item * 2                   # double-buffered out tile
            if use_scratch:
                b += tm_ * N2 * 4                        # f32 accumulator scratch
            b += (K1 * N1 + N1 * N2) * c_item * _WEIGHT_BUFS
            b += (N1 + N2) * 4 * _WEIGHT_BUFS
            b += tm_ * min(n_chunk, N1) * 8              # GEMM1 intermediate working set
            return b

        tm = max_tm
        while tm > 16 and vmem_bytes(tm) > _VMEM_BUDGET:
            tm //= 2
        # Clamp to the real problem size: no 16x padded rows for tiny batches.
        tm = max(16, min(tm, _round_up(M, 16)))
        Mp = _round_up(M, tm)
        # >=2 parallel grid steps when cheap: keeps v7x's 2nd TensorCore busy and
        # overlaps input DMA with compute; ~0.35us/step elsewhere (negligible).
        if Mp // tm < 2 and tm >= 32 and (tm // 2) % 16 == 0:
            tm //= 2
            Mp = _round_up(M, tm)
        grid = (Mp // tm,)

        xp = jnp.zeros((Mp, K1), cdt).at[:M, :bert_dim].set(x2d.astype(cdt))

        def const_spec(shape):
            # Weights/biases never change across the grid; single-buffer them
            # when supported (probed once at import time).
            if _HAS_BUFFERED:
                return pl.BlockSpec(shape, lambda i: (0, 0),
                                    pipeline_mode=pl.Buffered(1))
            return pl.BlockSpec(shape, lambda i: (0, 0))

        kernel = functools.partial(idea_layer_kernel, n_chunk=n_chunk, n1=N1)

        cost = pl.CostEstimate(
            flops=2 * Mp * K1 * N1 + 2 * Mp * N1 * N2,
            transcendentals=0,
            bytes_accessed=int(Mp * K1 * c_item + (K1 * N1 + N1 * N2) * c_item
                               + (N1 + N2) * 4 + Mp * N2 * o_item),
        )

        outp = pl.pallas_call(
            kernel,
            out_shape=jax.ShapeDtypeStruct((Mp, N2), out_dtype),
            grid_spec=pltpu.PrefetchScalarGridSpec(
                num_scalar_prefetch=0,
                grid=grid,
                in_specs=[
                    pl.BlockSpec((tm, K1), lambda i: (i, 0)),
                    const_spec((K1, N1)),
                    const_spec((1, N1)),
                    const_spec((N1, N2)),
                    const_spec((1, N2)),
                ],
                out_specs=pl.BlockSpec((tm, N2), lambda i: (i, 0)),
                scratch_shapes=([pltpu.VMEM((tm, N2), jnp.float32)]
                                if use_scratch else []),
            ),
            compiler_params=pltpu.CompilerParams(
                dimension_semantics=("parallel",),
                vmem_limit_bytes=_VMEM_BUDGET,
            ),
            cost_estimate=cost,
        )(xp, w1p, b1p, w2p, b2p)

        return outp[:M, :hidden_dim].reshape(*lead, hidden_dim)

    apply_jit = jax.jit(apply_fn)

    def forward(x):
        return apply_jit(x, w1p, b1p, w2p, b2p)

    return forward


def init_params(key, bert_dim, hidden_dim, dtype=jnp.float32):
    """Deterministic synthetic params. Weights stored as (in, out)."""
    k1, k2, k3, k4 = jax.random.split(key, 4)
    two_hidden = 2 * hidden_dim
    lim1 = 1.0 / jnp.sqrt(bert_dim)
    lim2 = 1.0 / jnp.sqrt(two_hidden)
    w1 = jax.random.uniform(k1, (bert_dim, two_hidden), dtype, -lim1, lim1)
    b1 = jax.random.uniform(k2, (two_hidden,), dtype, -lim1, lim1)
    w2 = jax.random.uniform(k3, (two_hidden, hidden_dim), dtype, -lim2, lim2)
    b2 = jax.random.uniform(k4, (hidden_dim,), dtype, -lim2, lim2)
    return w1, b1, w2, b2


if __name__ == "__main__":
    key = jax.random.PRNGKey(0)
    batch, seq = 2, 8
    bert_dim, hidden_dim = 32, 16

    kx, kp = jax.random.split(key)
    x = jax.random.normal(kx, (batch, seq, bert_dim), jnp.float32)
    w1, b1, w2, b2 = init_params(kp, bert_dim, hidden_dim)

    # Pure-JAX f32 reference (matches the PyTorch module semantics).
    ref = jnp.maximum(x.reshape(-1, bert_dim) @ w1 + b1, 0.0) @ w2 + b2
    ref = ref.reshape(batch, seq, hidden_dim)

    # f32 compute path: tight numerical check of the fused kernel.
    layer_f32 = make_idea_layer(w1, b1, w2, b2, compute_dtype=jnp.float32)
    out_f32 = jax.block_until_ready(layer_f32(x))
    assert out_f32.shape == (batch, seq, hidden_dim)
    assert jnp.allclose(out_f32, ref, atol=1e-5, rtol=1e-5)

    # bf16 MXU-input path (recommended on v6e/v7x); accumulation stays f32.
    layer_bf16 = make_idea_layer(w1, b1, w2, b2, compute_dtype=jnp.bfloat16)
    out_bf16 = jax.block_until_ready(layer_bf16(x))
    assert out_bf16.shape == (batch, seq, hidden_dim)
    assert jnp.allclose(out_bf16, ref, atol=2e-2, rtol=2e-2)

    print("KERNEL_OK")
</pallas_src>

<mosaic_0001>
module attributes {stable_mosaic.version = 11 : i64} {
  func.func @idea_layer_kernel(%arg0: i32, %arg1: memref<16x128xf32, #tpu.memory_space<vmem>>, %arg2: memref<128x128xf32, #tpu.memory_space<vmem>>, %arg3: memref<1x128xf32, #tpu.memory_space<vmem>>, %arg4: memref<128x128xf32, #tpu.memory_space<vmem>>, %arg5: memref<1x128xf32, #tpu.memory_space<vmem>>, %arg6: memref<16x128xf32, #tpu.memory_space<vmem>>) attributes {dimension_semantics = [#tpu.dimension_semantics<parallel>], iteration_bounds = array<i64: 1>, scalar_prefetch = 0 : i64, scratch_operands = 0 : i64, tpu.core_type = #tpu.core_type<tc>, window_params = [{transform_indices = @transform_0, window_bounds = array<i64: 16, 128>}, {pipeline_mode = #tpu.pipeline_mode<synchronous>, transform_indices = @transform_1, window_bounds = array<i64: 128, 128>}, {pipeline_mode = #tpu.pipeline_mode<synchronous>, transform_indices = @transform_2, window_bounds = array<i64: 1, 128>}, {pipeline_mode = #tpu.pipeline_mode<synchronous>, transform_indices = @transform_3, window_bounds = array<i64: 128, 128>}, {pipeline_mode = #tpu.pipeline_mode<synchronous>, transform_indices = @transform_4, window_bounds = array<i64: 1, 128>}, {transform_indices = @transform_5, window_bounds = array<i64: 16, 128>}]} {
    %c0 = arith.constant 0 : index
    %c0_0 = arith.constant 0 : index
    %0 = vector.load %arg1[%c0, %c0_0] : memref<16x128xf32, #tpu.memory_space<vmem>>, vector<16x128xf32>
    %c0_1 = arith.constant 0 : index
    %c0_2 = arith.constant 0 : index
    %1 = vector.load %arg2[%c0_1, %c0_2] : memref<128x128xf32, #tpu.memory_space<vmem>>, vector<128x128xf32>
    %cst = arith.constant dense<0.000000e+00> : vector<16x128xf32>
    %2 = tpu.matmul %0, %1, %cst {dimension_numbers = #tpu.dot_dimension_numbers<[1], [0], [0], [1], [0, 0, 1, 1], [], []>} : vector<16x128xf32>, vector<128x128xf32>, vector<16x128xf32> -> vector<16x128xf32>
    %c0_3 = arith.constant 0 : index
    %c0_4 = arith.constant 0 : index
    %3 = vector.load %arg3[%c0_3, %c0_4] : memref<1x128xf32, #tpu.memory_space<vmem>>, vector<1x128xf32>
    %4 = vector.broadcast %3 : vector<1x128xf32> to vector<16x128xf32>
    %5 = arith.addf %2, %4 : vector<16x128xf32>
    %cst_5 = arith.constant 0.000000e+00 : f32
    %6 = vector.broadcast %cst_5 : f32 to vector<16x128xf32>
    %7 = arith.maximumf %5, %6 : vector<16x128xf32>
    %c0_6 = arith.constant 0 : index
    %c0_7 = arith.constant 0 : index
    %8 = vector.load %arg4[%c0_6, %c0_7] : memref<128x128xf32, #tpu.memory_space<vmem>>, vector<128x128xf32>
    %cst_8 = arith.constant dense<0.000000e+00> : vector<16x128xf32>
    %9 = tpu.matmul %7, %8, %cst_8 {dimension_numbers = #tpu.dot_dimension_numbers<[1], [0], [0], [1], [0, 0, 1, 1], [], []>} : vector<16x128xf32>, vector<128x128xf32>, vector<16x128xf32> -> vector<16x128xf32>
    %c0_9 = arith.constant 0 : index
    %c0_10 = arith.constant 0 : index
    %10 = vector.load %arg5[%c0_9, %c0_10] : memref<1x128xf32, #tpu.memory_space<vmem>>, vector<1x128xf32>
    %11 = vector.broadcast %10 : vector<1x128xf32> to vector<16x128xf32>
    %12 = arith.addf %9, %11 : vector<16x128xf32>
    %c0_11 = arith.constant 0 : index
    %c0_12 = arith.constant 0 : index
    %13 = vector.load %arg6[%c0_11, %c0_12] : memref<16x128xf32, #tpu.memory_space<vmem>>, vector<16x128xf32>
    tpu.vector_store %arg6[%c0_11, %c0_12], %12 {strides = array<i32>} : memref<16x128xf32, #tpu.memory_space<vmem>>, vector<16x128xf32>,
    return
  }
  func.func @transform_0(%arg0: i32) -> (i32, i32) {
    %c0_i32 = arith.constant 0 : i32
    %c0_i32_0 = arith.constant 0 : i32
    return %arg0, %c0_i32 : i32, i32
  }
  func.func @transform_1(%arg0: i32) -> (i32, i32) {
    %c0_i32 = arith.constant 0 : i32
    %c0_i32_0 = arith.constant 0 : i32
    %c0_i32_1 = arith.constant 0 : i32
    return %c0_i32, %c0_i32_0 : i32, i32
  }
  func.func @transform_2(%arg0: i32) -> (i32, i32) {
    %c0_i32 = arith.constant 0 : i32
    %c0_i32_0 = arith.constant 0 : i32
    %c0_i32_1 = arith.constant 0 : i32
    return %c0_i32, %c0_i32_0 : i32, i32
  }
  func.func @transform_3(%arg0: i32) -> (i32, i32) {
    %c0_i32 = arith.constant 0 : i32
    %c0_i32_0 = arith.constant 0 : i32
    %c0_i32_1 = arith.constant 0 : i32
    return %c0_i32, %c0_i32_0 : i32, i32
  }
  func.func @transform_4(%arg0: i32) -> (i32, i32) {
    %c0_i32 = arith.constant 0 : i32
    %c0_i32_0 = arith.constant 0 : i32
    %c0_i32_1 = arith.constant 0 : i32
    return %c0_i32, %c0_i32_0 : i32, i32
  }
  func.func @transform_5(%arg0: i32) -> (i32, i32) {
    %c0_i32 = arith.constant 0 : i32
    %c0_i32_0 = arith.constant 0 : i32
    return %arg0, %c0_i32 : i32, i32
  }
}

</mosaic_0001>

<llo_original>
// kernel: apply_fn.1
$region0: #{apply_fn.1}
  #allocation0 [shape = 'u32[]', space=smem, size = 0x4, offset = 0x4, fixed_abs, tag = 'smem constant byte address 0x4 - core index']
  #allocation1 [shape = 'u32[72,128]{1,0:T(1,128)}', space=vmem, size = 0x9000, scoped, tag = 'internal scratch']
  %s0 = inlined_call_operand.vmem [shape: f32[16,128], index: 0, kind: input, shape index: {}]
  %s1 = inlined_call_operand.hbm [shape: f32[128,128], index: 1, kind: input, shape index: {}]
  %s2 = inlined_call_operand.vmem [shape: f32[1,128], index: 2, kind: input, shape index: {}]
  %s3 = inlined_call_operand.hbm [shape: f32[128,128], index: 3, kind: input, shape index: {}]
  %s4 = inlined_call_operand.vmem [shape: f32[1,128], index: 4, kind: input, shape index: {}]
  %s5 = inlined_call_operand.vmem [shape: f32[16,128], index: 5, kind: output, shape index: {}]
  %s6 = sld [smem:[#allocation0]]
  $region38: #{apply_fn.1} parent=0
    _
  %s8 = ssub.s32 1, %s6
  %s9 = scalar_select 0, %s8, %s6
  $region1: #{apply_fn.1} parent=0
    #allocation2 [shape = 'u8[65536]{0}', space=vmem, size = 0x10000, scoped, tag = 'input window, operand 1, single buffered']
    #allocation3 [shape = 's32[1]{0}', space=sflag, size = 0x4, scoped, tag = 'scoped memory for apply_fn.1']
    #allocation4 [shape = 'u8[65536]{0}', space=vmem, size = 0x10000, scoped, tag = 'input window, operand 3, single buffered']
    #allocation5 [shape = 's32[1]{0}', space=sflag, size = 0x4, scoped, tag = 'scoped memory for apply_fn.1']
    %10 = vsyncpa [#allocation3], 0
    %11 = vsyncpa [#allocation5], 0
    // Predicated region
    $region2: #{apply_fn.1} parent=1 // pred_check
      _
    $region3: #{apply_fn.1} parent=1 // pred_check_branch
      %13 = sbr.rel (0) target = $region5
    $region4: #{apply_fn.1} parent=1 // pred_region
      _
    $region5: #{apply_fn.1} parent=1 // pred_fallthru
      _
    // Predicated region
    $region6: #{apply_fn.1} parent=1 // pred_check
      _
    $region7: #{apply_fn.1} parent=1 // pred_check_branch
      %15 = sbr.rel (0) target = $region9
    $region8: #{apply_fn.1} parent=1 // pred_region
      %17 = vsyncadd [#allocation3], 0
      %s18 = sshll.u32 %s1, 4
      %s19 = int_to_ptr.hbm [resolvable:$true] %s18
      %s20 = sshll.u32 [#allocation2], 4
      %s21 = int_to_ptr.vmem [resolvable:$true] %s20
      %26 = dma.hbm_to_vmem [thread:$0]  %s19, 2048, %s21, [#allocation3], 128, 128, 8
    $region9: #{apply_fn.1} parent=1 // pred_fallthru
      _
    // Predicated region
    $region10: #{apply_fn.1} parent=1 // pred_check
      _
    $region11: #{apply_fn.1} parent=1 // pred_check_branch
      %28 = sbr.rel (0) target = $region13
    $region12: #{apply_fn.1} parent=1 // pred_region
      _
    $region13: #{apply_fn.1} parent=1 // pred_fallthru
      _
    // Predicated region
    $region14: #{apply_fn.1} parent=1 // pred_check
      _
    $region15: #{apply_fn.1} parent=1 // pred_check_branch
      %30 = sbr.rel (0) target = $region17
    $region16: #{apply_fn.1} parent=1 // pred_region
      %32 = vsyncadd [#allocation5], 0
      %s33 = sshll.u32 %s3, 4
      %s34 = int_to_ptr.hbm [resolvable:$true] %s33
      %s35 = sshll.u32 [#allocation4], 4
      %s36 = int_to_ptr.vmem [resolvable:$true] %s35
      %41 = dma.hbm_to_vmem [thread:$0]  %s34, 2048, %s36, [#allocation5], 128, 128, 8
    $region17: #{apply_fn.1} parent=1 // pred_fallthru
      _
    // Predicated region
    $region18: #{apply_fn.1} parent=1 // pred_check
      _
    $region19: #{apply_fn.1} parent=1 // pred_check_branch
      %43 = sbr.rel (0) target = $region21
    $region20: #{apply_fn.1} parent=1 // pred_region
      _
    $region21: #{apply_fn.1} parent=1 // pred_fallthru
      _
    // Predicated region
    $region22: #{apply_fn.1} parent=1 // pred_check
      _
    $region23: #{apply_fn.1} parent=1 // pred_check_branch
      %45 = sbr.rel (0) target = $region25
    $region24: #{apply_fn.1} parent=1 // pred_region
      %47 = dma.done [#allocation3], 2048
    $region25: #{apply_fn.1} parent=1 // pred_fallthru
      _
    // Predicated region
    $region26: #{apply_fn.1} parent=1 // pred_check
      _
    $region27: #{apply_fn.1} parent=1 // pred_check_branch
      %49 = sbr.rel (0) target = $region29
    $region28: #{apply_fn.1} parent=1 // pred_region
      %51 = dma.done [#allocation5], 2048
    $region29: #{apply_fn.1} parent=1 // pred_fallthru
      _
    %v52 = vld [vmem:[%s0] sm:$0xff]
    %v53 = vld [vmem:[%s0 + $0x8] sm:$0xff]
    %v54 = vld [vmem:[#allocation2] sm:$0xff]
    %v55 = vld [vmem:[#allocation2 + $0x8] sm:$0xff]
    %v56 = vld [vmem:[#allocation2 + $0x10] sm:$0xff]
    %v57 = vld [vmem:[#allocation2 + $0x18] sm:$0xff]
    %v58 = vld [vmem:[#allocation2 + $0x20] sm:$0xff]
    %v59 = vld [vmem:[#allocation2 + $0x28] sm:$0xff]
    %v60 = vld [vmem:[#allocation2 + $0x30] sm:$0xff]
    %v61 = vld [vmem:[#allocation2 + $0x38] sm:$0xff]
    %v62 = vld [vmem:[#allocation2 + $0x40] sm:$0xff]
    %v63 = vld [vmem:[#allocation2 + $0x48] sm:$0xff]
    %v64 = vld [vmem:[#allocation2 + $0x50] sm:$0xff]
    %v65 = vld [vmem:[#allocation2 + $0x58] sm:$0xff]
    %v66 = vld [vmem:[#allocation2 + $0x60] sm:$0xff]
    %v67 = vld [vmem:[#allocation2 + $0x68] sm:$0xff]
    %v68 = vld [vmem:[#allocation2 + $0x70] sm:$0xff]
    %v69 = vld [vmem:[#allocation2 + $0x78] sm:$0xff]
    %v70 = vld [vmem:[%s2] sm:$0x1]
    %v72 = vperm.slane %v70, 0
    %74 = vmatpush.msra.mxu0 %v69
    %75 = vmatpush.msra.mxu0 %v68
    %76 = vmatpush.msra.mxu0 %v67
    %77 = vmatpush.msra.mxu0 %v66
    %78 = vmatpush.msra.mxu0 %v65
    %79 = vmatpush.msra.mxu0 %v64
    %80 = vmatpush.msra.mxu0 %v63
    %81 = vmatpush.msra.mxu0 %v62
    %82 = vmatpush.msra.mxu0 %v61
    %83 = vmatpush.msra.mxu0 %v60
    %84 = vmatpush.msra.mxu0 %v59
    %85 = vmatpush.msra.mxu0 %v58
    %86 = vmatpush.msra.mxu0 %v57
    %87 = vmatpush.msra.mxu0 %v56
    %88 = vmatpush.msra.mxu0 %v55
    %89 = vmatpush.msra.mxu0 %v54
    %90 = vmatmul.f32.gmra.mxu0 %v52
    %v91 = vpop.f32.mrf.mxu0
    %v92 = vadd.f32 %v72, %v91
    %93 = vmatmul.f32.gmra.mxu0 %v53
    %v94 = vpop.f32.mrf.mxu0
    %v95 = vadd.f32 %v72, %v94
    %96 = vdwg.mxu0
    %v97 = vmax.f32 %v92, 0.0
    %v98 = vmax.f32 %v95, 0.0
    %v99 = vld [vmem:[#allocation4] sm:$0xff]
    %v100 = vld [vmem:[#allocation4 + $0x8] sm:$0xff]
    %v101 = vld [vmem:[#allocation4 + $0x10] sm:$0xff]
    %v102 = vld [vmem:[#allocation4 + $0x18] sm:$0xff]
    %v103 = vld [vmem:[#allocation4 + $0x20] sm:$0xff]
    %v104 = vld [vmem:[#allocation4 + $0x28] sm:$0xff]
    %v105 = vld [vmem:[#allocation4 + $0x30] sm:$0xff]
    %v106 = vld [vmem:[#allocation4 + $0x38] sm:$0xff]
    %v107 = vld [vmem:[#allocation4 + $0x40] sm:$0xff]
    %v108 = vld [vmem:[#allocation4 + $0x48] sm:$0xff]
    %v109 = vld [vmem:[#allocation4 + $0x50] sm:$0xff]
    %v110 = vld [vmem:[#allocation4 + $0x58] sm:$0xff]
    %v111 = vld [vmem:[#allocation4 + $0x60] sm:$0xff]
    %v112 = vld [vmem:[#allocation4 + $0x68] sm:$0xff]
    %v113 = vld [vmem:[#allocation4 + $0x70] sm:$0xff]
    %v114 = vld [vmem:[#allocation4 + $0x78] sm:$0xff]
    %v115 = vld [vmem:[%s4] sm:$0x1]
    %v117 = vperm.slane %v115, 0
    %119 = vmatpush.msra.mxu0 %v114
    %120 = vmatpush.msra.mxu0 %v113
    %121 = vmatpush.msra.mxu0 %v112
    %122 = vmatpush.msra.mxu0 %v111
    %123 = vmatpush.msra.mxu0 %v110
    %124 = vmatpush.msra.mxu0 %v109
    %125 = vmatpush.msra.mxu0 %v108
    %126 = vmatpush.msra.mxu0 %v107
    %127 = vmatpush.msra.mxu0 %v106
    %128 = vmatpush.msra.mxu0 %v105
    %129 = vmatpush.msra.mxu0 %v104
    %130 = vmatpush.msra.mxu0 %v103
    %131 = vmatpush.msra.mxu0 %v102
    %132 = vmatpush.msra.mxu0 %v101
    %133 = vmatpush.msra.mxu0 %v100
    %134 = vmatpush.msra.mxu0 %v99
    %135 = vmatmul.f32.gmra.mxu0 %v97
    %v136 = vpop.f32.mrf.mxu0
    %v137 = vadd.f32 %v117, %v136
    %138 = vmatmul.f32.gmra.mxu0 %v98
    %v139 = vpop.f32.mrf.mxu0
    %v140 = vadd.f32 %v117, %v139
    %141 = vdwg.mxu0
    %142 = vst [vmem:[%s5] sm:$0xff] %v137
    %143 = vst [vmem:[%s5 + $0x8] sm:$0xff] %v140
    // Predicated region
    $region30: #{apply_fn.1} parent=1 // pred_check
      _
    $region31: #{apply_fn.1} parent=1 // pred_check_branch
      %145 = sbr.rel (0) target = $region33
    $region32: #{apply_fn.1} parent=1 // pred_region
      _
    $region33: #{apply_fn.1} parent=1 // pred_fallthru
      _
    // Predicated region
    $region34: #{apply_fn.1} parent=1 // pred_check
      _
    $region35: #{apply_fn.1} parent=1 // pred_check_branch
      %147 = sbr.rel (0) target = $region37
    $region36: #{apply_fn.1} parent=1 // pred_region
      _
    $region37: #{apply_fn.1} parent=1 // pred_fallthru
      _
    %148 = vsyncpa [#allocation3], 1
    %149 = vsyncpa [#allocation5], 1

</llo_original>
